<compile_context>
chip_gen: v7x
topology: tpu7x:2x2x1
jax: 0.10.0
libtpu: 0.0.40
codegen_flags: <defaults>
</compile_context>

<pallas_src>
import functools

import jax
import jax.numpy as jnp
from jax.experimental import pallas as pl
from jax.experimental.pallas import tpu as pltpu


def _round_up(x, m):
    return ((x + m - 1) // m) * m


def _vmem_capacity_bytes():
    try:
        return int(pltpu.get_tpu_info().vmem_capacity_bytes)
    except Exception:
        return 64 * 1024 * 1024  # conservative default: v7x per-TC VMEM


# ---------------------------------------------------------------------------
# Kernels
# ---------------------------------------------------------------------------

def _ln_core(x, w_ref, b_ref, o_ref, *, eps, inv_h):
    """x: (TR, H) f32. TF-style LayerNorm, two-pass stats (matches PyTorch)."""
    mean = jnp.sum(x, axis=-1, keepdims=True) * inv_h
    xc = x - mean
    var = jnp.sum(xc * xc, axis=-1, keepdims=True) * inv_h
    inv = jax.lax.rsqrt(var + eps)
    # w_ref/b_ref are already f32 (cast hoisted into the wrapper).
    o_ref[...] = (xc * inv * w_ref[...] + b_ref[...]).astype(o_ref.dtype)


def _layernorm_kernel(x_ref, w_ref, b_ref, o_ref, *, eps, inv_h):
    _ln_core(x_ref[...].astype(jnp.float32), w_ref, b_ref, o_ref,
             eps=eps, inv_h=inv_h)


def _add_layernorm_kernel(x_ref, r_ref, w_ref, b_ref, o_ref, *, eps, inv_h):
    x = x_ref[...].astype(jnp.float32) + r_ref[...].astype(jnp.float32)
    _ln_core(x, w_ref, b_ref, o_ref, eps=eps, inv_h=inv_h)


def _add_layernorm_sum_kernel(x_ref, r_ref, w_ref, b_ref, o_ref, s_ref, *,
                              eps, inv_h):
    x = x_ref[...].astype(jnp.float32) + r_ref[...].astype(jnp.float32)
    s_ref[...] = x.astype(s_ref.dtype)          # fused residual-sum output
    _ln_core(x, w_ref, b_ref, o_ref, eps=eps, inv_h=inv_h)


# ---------------------------------------------------------------------------
# Wrapper
# ---------------------------------------------------------------------------

_SEM_START = [0]  # memoized index into the dimension-semantics candidate list


def _dimension_semantics_candidates():
    cands = []
    cp = getattr(pltpu, "CORE_PARALLEL", None)
    if cp is not None:
        cands.append((cp,))          # shard the row grid across TCs (v7x: ~2x BW)
    cands.append(("parallel",))      # portable fallback
    return cands


def _run_ln_call(kernel, args, out_shape, grid, in_specs, out_specs, vmem_limit):
    cands = _dimension_semantics_candidates()
    last_err = None
    for idx in range(_SEM_START[0], len(cands)):
        try:
            out = pl.pallas_call(
                kernel,
                out_shape=out_shape,
                grid_spec=pltpu.PrefetchScalarGridSpec(
                    num_scalar_prefetch=0,
                    grid=grid,
                    in_specs=in_specs,
                    out_specs=out_specs,
                ),
                compiler_params=pltpu.CompilerParams(
                    dimension_semantics=cands[idx],
                    vmem_limit_bytes=vmem_limit,
                ),
            )(*args)
            _SEM_START[0] = idx
            return out
        except Exception as e:  # lowering rejected on this chip/build -> fall back
            last_err = e
    raise last_err


def layer_norm(x, weight, bias, eps=1e-12, residual=None, return_sum=False,
               row_tile=None):
    """TF-style LayerNorm over the last axis of x (eps inside the sqrt).

    residual:   optional tensor with x's shape; computes LayerNorm(x + residual)
                fused in a single HBM pass (the Encoder's add+LN pair).
    return_sum: with residual, also return the fused sum (x + residual);
                result is (ln_out, sum_out).
    """
    if return_sum and residual is None:
        raise ValueError("return_sum=True requires a residual operand")

    orig_shape = x.shape
    h = orig_shape[-1]
    x2 = x.reshape(-1, h)
    n_rows = x2.shape[0]

    operands = [x2]
    if residual is not None:
        operands.append(residual.reshape(-1, h))

    itemsize = jnp.dtype(x.dtype).itemsize
    # dtype-correct sublane multiple: 8 (f32), 16 (bf16), 32 (int8/fp8).
    sublane = {4: 8, 2: 16, 1: 32}.get(itemsize, 8)

    n_in = len(operands)
    n_out = 2 if return_sum else 1

    cap = _vmem_capacity_bytes()
    # 48 MiB scoped limit on 64 MiB parts (v7x), 96 MiB on 128 MiB parts.
    vmem_limit = max(32 << 20, (cap * 3) // 4)

    if row_tile is None:
        budget = (vmem_limit * 2) // 3
        # Count every double-buffered operand at its native dtype plus ~3 slabs
        # of in-kernel f32 temporaries (x in f32, x-mean, scaled product).
        bytes_per_row = (n_in + n_out) * 2 * h * itemsize + 3 * h * 4
        tr_cap = max(sublane, budget // max(bytes_per_row, 1))
        # Don't split below a ~4 MiB input tile just to create grid steps; aim
        # for >= 4 steps (2 per TC) only when rows are plentiful.
        min_tile_rows = _round_up(pl.cdiv(4 << 20, max(h * itemsize, 1)), sublane)
        steps_rows = _round_up(pl.cdiv(n_rows, 4), sublane)
        tr = min(tr_cap, 4096, max(min_tile_rows, steps_rows))
    else:
        tr = row_tile

    tr = max(sublane, (tr // sublane) * sublane)   # sublane-aligned
    tr = min(tr, n_rows)                           # block == full dim when it covers all rows

    grid = (pl.cdiv(n_rows, tr),)                  # partial last block handled by Pallas

    # Hoist the f32 cast of weight/bias out of the per-step VPU stream.
    w2 = weight.astype(jnp.float32).reshape(1, h)
    b2 = bias.astype(jnp.float32).reshape(1, h)

    row_spec = pl.BlockSpec((tr, h), lambda i: (i, 0))
    const_spec = pl.BlockSpec((1, h), lambda i: (0, 0))   # constant block: no re-DMA per step

    in_specs = [row_spec] * n_in + [const_spec, const_spec]
    args = tuple(operands) + (w2, b2)

    eps_f = float(eps)
    inv_h = 1.0 / float(h)

    if residual is None:
        kernel = functools.partial(_layernorm_kernel, eps=eps_f, inv_h=inv_h)
        out_shape = jax.ShapeDtypeStruct((n_rows, h), x.dtype)
        out_specs = row_spec
    elif not return_sum:
        kernel = functools.partial(_add_layernorm_kernel, eps=eps_f, inv_h=inv_h)
        out_shape = jax.ShapeDtypeStruct((n_rows, h), x.dtype)
        out_specs = row_spec
    else:
        kernel = functools.partial(_add_layernorm_sum_kernel, eps=eps_f, inv_h=inv_h)
        out_shape = (jax.ShapeDtypeStruct((n_rows, h), x.dtype),
                     jax.ShapeDtypeStruct((n_rows, h), x.dtype))
        out_specs = [row_spec, row_spec]

    out = _run_ln_call(kernel, args, out_shape, grid, in_specs, out_specs,
                       vmem_limit)

    if return_sum:
        ln_out, sum_out = out
        return ln_out.reshape(orig_shape), sum_out.reshape(orig_shape)
    return out.reshape(orig_shape)


# ---------------------------------------------------------------------------
# Reference + demo
# ---------------------------------------------------------------------------

def _reference_layer_norm(x, weight, bias, eps):
    u = jnp.mean(x, axis=-1, keepdims=True)
    s = jnp.mean((x - u) ** 2, axis=-1, keepdims=True)
    return weight * ((x - u) / jnp.sqrt(s + eps)) + bias


if __name__ == "__main__":
    key = jax.random.PRNGKey(0)
    k1, k2, k3, k4 = jax.random.split(key, 4)

    # 1) Small demo matching the module's usage (batch=2, seq=8, hidden=32).
    #    NOTE: H=32 (<128 lanes) exercises the masked-store path; real encoder
    #    hidden sizes (e.g. 768 = 6*128) keep the output slab lane-dense.
    batch, seq, hidden = 2, 8, 32
    x = jax.random.normal(k1, (batch, seq, hidden), dtype=jnp.float32)
    weight = jnp.ones((hidden,), dtype=jnp.float32)   # nn.Parameter(torch.ones(hidden))
    bias = jnp.zeros((hidden,), dtype=jnp.float32)    # nn.Parameter(torch.zeros(hidden))

    y = layer_norm(x, weight, bias, eps=1e-12)
    jax.block_until_ready(y)
    ref = _reference_layer_norm(x, weight, bias, 1e-12)
    assert jnp.allclose(y, ref, atol=1e-5, rtol=1e-5), "mismatch (plain LN, small)"

    # 2) Lane-dense hidden (multiple of 128), multiple grid steps + partial last
    #    block (300 rows with a forced 128-row tile).
    b2_, s2_, h2_ = 3, 100, 256
    x2 = jax.random.normal(k2, (b2_, s2_, h2_), dtype=jnp.float32) * 2.0 + 0.5
    w2 = jax.random.normal(k3, (h2_,), dtype=jnp.float32) * 0.1 + 1.0
    bb2 = jax.random.normal(k4, (h2_,), dtype=jnp.float32) * 0.1
    y2 = layer_norm(x2, w2, bb2, eps=1e-12, row_tile=128)
    jax.block_until_ready(y2)
    ref2 = _reference_layer_norm(x2, w2, bb2, 1e-12)
    assert jnp.allclose(y2, ref2, atol=1e-5, rtol=1e-5), "mismatch (plain LN, tiled)"

    # 3) Fused residual add + LN (the Encoder's `LN(x + sublayer(x))` pair),
    #    with the carried residual sum emitted by the same kernel.
    r2 = jax.random.normal(jax.random.PRNGKey(7), (b2_, s2_, h2_), dtype=jnp.float32)
    y3, s3 = layer_norm(x2, w2, bb2, eps=1e-12, residual=r2, return_sum=True,
                        row_tile=128)
    jax.block_until_ready((y3, s3))
    ref3 = _reference_layer_norm(x2 + r2, w2, bb2, 1e-12)
    assert jnp.allclose(s3, x2 + r2, atol=1e-6, rtol=1e-6), "mismatch (fused sum)"
    assert jnp.allclose(y3, ref3, atol=1e-5, rtol=1e-5), "mismatch (fused add+LN)"

    # 4) Fused variant without the extra sum output, auto tile size.
    y4 = layer_norm(x2, w2, bb2, eps=1e-12, residual=r2)
    jax.block_until_ready(y4)
    assert jnp.allclose(y4, ref3, atol=1e-5, rtol=1e-5), "mismatch (fused add+LN, auto tile)"

    print("KERNEL_OK")
</pallas_src>

<mosaic_0001>
module attributes {stable_mosaic.version = 11 : i64} {
  func.func @_layernorm_kernel(%arg0: i32, %arg1: memref<16x32xf32, #tpu.memory_space<vmem>>, %arg2: memref<1x32xf32, #tpu.memory_space<vmem>>, %arg3: memref<1x32xf32, #tpu.memory_space<vmem>>, %arg4: memref<16x32xf32, #tpu.memory_space<vmem>>) attributes {dimension_semantics = [#tpu.dimension_semantics<core_parallel>], iteration_bounds = array<i64: 1>, scalar_prefetch = 0 : i64, scratch_operands = 0 : i64, tpu.core_type = #tpu.core_type<tc>, window_params = [{transform_indices = @transform_0, window_bounds = array<i64: 16, 32>}, {pipeline_mode = #tpu.pipeline_mode<synchronous>, transform_indices = @transform_1, window_bounds = array<i64: 1, 32>}, {pipeline_mode = #tpu.pipeline_mode<synchronous>, transform_indices = @transform_2, window_bounds = array<i64: 1, 32>}, {transform_indices = @transform_3, window_bounds = array<i64: 16, 32>}]} {
    %c0 = arith.constant 0 : index
    %c0_0 = arith.constant 0 : index
    %0 = vector.load %arg1[%c0, %c0_0] : memref<16x32xf32, #tpu.memory_space<vmem>>, vector<16x32xf32>
    %cst = arith.constant dense<0.000000e+00> : vector<16xf32>
    %1 = vector.multi_reduction <add>, %0, %cst [1] : vector<16x32xf32> to vector<16xf32>
    %2 = vector.shape_cast %1 : vector<16xf32> to vector<16x1xf32>
    %cst_1 = arith.constant 3.125000e-02 : f32
    %3 = vector.broadcast %cst_1 : f32 to vector<16x1xf32>
    %4 = arith.mulf %2, %3 : vector<16x1xf32>
    %5 = vector.broadcast %4 : vector<16x1xf32> to vector<16x32xf32>
    %6 = arith.subf %0, %5 : vector<16x32xf32>
    %7 = arith.mulf %6, %6 : vector<16x32xf32>
    %cst_2 = arith.constant dense<0.000000e+00> : vector<16xf32>
    %8 = vector.multi_reduction <add>, %7, %cst_2 [1] : vector<16x32xf32> to vector<16xf32>
    %9 = vector.shape_cast %8 : vector<16xf32> to vector<16x1xf32>
    %cst_3 = arith.constant 3.125000e-02 : f32
    %10 = vector.broadcast %cst_3 : f32 to vector<16x1xf32>
    %11 = arith.mulf %9, %10 : vector<16x1xf32>
    %cst_4 = arith.constant 9.99999996E-13 : f32
    %12 = vector.broadcast %cst_4 : f32 to vector<16x1xf32>
    %13 = arith.addf %11, %12 : vector<16x1xf32>
    %14 = math.rsqrt %13 : vector<16x1xf32>
    %15 = vector.broadcast %14 : vector<16x1xf32> to vector<16x32xf32>
    %16 = arith.mulf %6, %15 : vector<16x32xf32>
    %c0_5 = arith.constant 0 : index
    %c0_6 = arith.constant 0 : index
    %17 = vector.load %arg2[%c0_5, %c0_6] : memref<1x32xf32, #tpu.memory_space<vmem>>, vector<1x32xf32>
    %18 = vector.broadcast %17 : vector<1x32xf32> to vector<16x32xf32>
    %19 = arith.mulf %16, %18 : vector<16x32xf32>
    %c0_7 = arith.constant 0 : index
    %c0_8 = arith.constant 0 : index
    %20 = vector.load %arg3[%c0_7, %c0_8] : memref<1x32xf32, #tpu.memory_space<vmem>>, vector<1x32xf32>
    %21 = vector.broadcast %20 : vector<1x32xf32> to vector<16x32xf32>
    %22 = arith.addf %19, %21 : vector<16x32xf32>
    %c0_9 = arith.constant 0 : index
    %c0_10 = arith.constant 0 : index
    %23 = vector.load %arg4[%c0_9, %c0_10] : memref<16x32xf32, #tpu.memory_space<vmem>>, vector<16x32xf32>
    tpu.vector_store %arg4[%c0_9, %c0_10], %22 {strides = array<i32>} : memref<16x32xf32, #tpu.memory_space<vmem>>, vector<16x32xf32>,
    return
  }
  func.func @transform_0(%arg0: i32) -> (i32, i32) {
    %c0_i32 = arith.constant 0 : i32
    %c0_i32_0 = arith.constant 0 : i32
    return %arg0, %c0_i32 : i32, i32
  }
  func.func @transform_1(%arg0: i32) -> (i32, i32) {
    %c0_i32 = arith.constant 0 : i32
    %c0_i32_0 = arith.constant 0 : i32
    %c0_i32_1 = arith.constant 0 : i32
    return %c0_i32, %c0_i32_0 : i32, i32
  }
  func.func @transform_2(%arg0: i32) -> (i32, i32) {
    %c0_i32 = arith.constant 0 : i32
    %c0_i32_0 = arith.constant 0 : i32
    %c0_i32_1 = arith.constant 0 : i32
    return %c0_i32, %c0_i32_0 : i32, i32
  }
  func.func @transform_3(%arg0: i32) -> (i32, i32) {
    %c0_i32 = arith.constant 0 : i32
    %c0_i32_0 = arith.constant 0 : i32
    return %arg0, %c0_i32 : i32, i32
  }
}

module attributes {stable_mosaic.version = 11 : i64} {
  func.func @_layernorm_kernel(%arg0: i32, %arg1: memref<16x32xf32, #tpu.memory_space<vmem>>, %arg2: memref<1x32xf32, #tpu.memory_space<vmem>>, %arg3: memref<1x32xf32, #tpu.memory_space<vmem>>, %arg4: memref<16x32xf32, #tpu.memory_space<vmem>>) attributes {dimension_semantics = [#tpu.dimension_semantics<parallel>], iteration_bounds = array<i64: 1>, scalar_prefetch = 0 : i64, scratch_operands = 0 : i64, tpu.core_type = #tpu.core_type<tc>, window_params = [{transform_indices = @transform_0, window_bounds = array<i64: 16, 32>}, {pipeline_mode = #tpu.pipeline_mode<synchronous>, transform_indices = @transform_1, window_bounds = array<i64: 1, 32>}, {pipeline_mode = #tpu.pipeline_mode<synchronous>, transform_indices = @transform_2, window_bounds = array<i64: 1, 32>}, {transform_indices = @transform_3, window_bounds = array<i64: 16, 32>}]} {
    %c0 = arith.constant 0 : index
    %c0_0 = arith.constant 0 : index
    %0 = vector.load %arg1[%c0, %c0_0] : memref<16x32xf32, #tpu.memory_space<vmem>>, vector<16x32xf32>
    %cst = arith.constant dense<0.000000e+00> : vector<16xf32>
    %1 = vector.multi_reduction <add>, %0, %cst [1] : vector<16x32xf32> to vector<16xf32>
    %2 = vector.shape_cast %1 : vector<16xf32> to vector<16x1xf32>
    %cst_1 = arith.constant 3.125000e-02 : f32
    %3 = vector.broadcast %cst_1 : f32 to vector<16x1xf32>
    %4 = arith.mulf %2, %3 : vector<16x1xf32>
    %5 = vector.broadcast %4 : vector<16x1xf32> to vector<16x32xf32>
    %6 = arith.subf %0, %5 : vector<16x32xf32>
    %7 = arith.mulf %6, %6 : vector<16x32xf32>
    %cst_2 = arith.constant dense<0.000000e+00> : vector<16xf32>
    %8 = vector.multi_reduction <add>, %7, %cst_2 [1] : vector<16x32xf32> to vector<16xf32>
    %9 = vector.shape_cast %8 : vector<16xf32> to vector<16x1xf32>
    %cst_3 = arith.constant 3.125000e-02 : f32
    %10 = vector.broadcast %cst_3 : f32 to vector<16x1xf32>
    %11 = arith.mulf %9, %10 : vector<16x1xf32>
    %cst_4 = arith.constant 9.99999996E-13 : f32
    %12 = vector.broadcast %cst_4 : f32 to vector<16x1xf32>
    %13 = arith.addf %11, %12 : vector<16x1xf32>
    %14 = math.rsqrt %13 : vector<16x1xf32>
    %15 = vector.broadcast %14 : vector<16x1xf32> to vector<16x32xf32>
    %16 = arith.mulf %6, %15 : vector<16x32xf32>
    %c0_5 = arith.constant 0 : index
    %c0_6 = arith.constant 0 : index
    %17 = vector.load %arg2[%c0_5, %c0_6] : memref<1x32xf32, #tpu.memory_space<vmem>>, vector<1x32xf32>
    %18 = vector.broadcast %17 : vector<1x32xf32> to vector<16x32xf32>
    %19 = arith.mulf %16, %18 : vector<16x32xf32>
    %c0_7 = arith.constant 0 : index
    %c0_8 = arith.constant 0 : index
    %20 = vector.load %arg3[%c0_7, %c0_8] : memref<1x32xf32, #tpu.memory_space<vmem>>, vector<1x32xf32>
    %21 = vector.broadcast %20 : vector<1x32xf32> to vector<16x32xf32>
    %22 = arith.addf %19, %21 : vector<16x32xf32>
    %c0_9 = arith.constant 0 : index
    %c0_10 = arith.constant 0 : index
    %23 = vector.load %arg4[%c0_9, %c0_10] : memref<16x32xf32, #tpu.memory_space<vmem>>, vector<16x32xf32>
    tpu.vector_store %arg4[%c0_9, %c0_10], %22 {strides = array<i32>} : memref<16x32xf32, #tpu.memory_space<vmem>>, vector<16x32xf32>,
    return
  }
  func.func @transform_0(%arg0: i32) -> (i32, i32) {
    %c0_i32 = arith.constant 0 : i32
    %c0_i32_0 = arith.constant 0 : i32
    return %arg0, %c0_i32 : i32, i32
  }
  func.func @transform_1(%arg0: i32) -> (i32, i32) {
    %c0_i32 = arith.constant 0 : i32
    %c0_i32_0 = arith.constant 0 : i32
    %c0_i32_1 = arith.constant 0 : i32
    return %c0_i32, %c0_i32_0 : i32, i32
  }
  func.func @transform_2(%arg0: i32) -> (i32, i32) {
    %c0_i32 = arith.constant 0 : i32
    %c0_i32_0 = arith.constant 0 : i32
    %c0_i32_1 = arith.constant 0 : i32
    return %c0_i32, %c0_i32_0 : i32, i32
  }
  func.func @transform_3(%arg0: i32) -> (i32, i32) {
    %c0_i32 = arith.constant 0 : i32
    %c0_i32_0 = arith.constant 0 : i32
    return %arg0, %c0_i32 : i32, i32
  }
}

</mosaic_0001>

<llo_original>
// kernel: tpu_custom_call.1
$region0: #{tpu_custom_call.1}
  #allocation0 [shape = 'u32[]', space=smem, size = 0x4, offset = 0x4, fixed_abs, tag = 'smem constant byte address 0x4 - core index']
  #allocation1 [shape = 'u32[144,128]{1,0:T(1,128)}', space=vmem, size = 0x12000, scoped, tag = 'internal scratch']
  %s0 = inlined_call_operand.hbm [shape: f32[16,32], index: 0, kind: input, shape index: {}]
  %s1 = inlined_call_operand.vmem [shape: f32[1,32], index: 1, kind: input, shape index: {}]
  %s2 = inlined_call_operand.vmem [shape: f32[1,32], index: 2, kind: input, shape index: {}]
  %s3 = inlined_call_operand.hbm [shape: f32[16,32], index: 3, kind: output, shape index: {}]
  %s4 = sld [smem:[#allocation0]]
  $region26: #{tpu_custom_call.1} parent=0
    _
  %s6 = ssub.s32 1, %s4
  %s7 = scalar_select 0, %s6, %s4
  $region1: #{tpu_custom_call.1} parent=0
    #allocation2 [shape = 'u8[8192]{0}', space=vmem, size = 0x2000, scoped, tag = 'input window, operand 0, single buffered']
    #allocation3 [shape = 's32[1]{0}', space=sflag, size = 0x4, scoped, tag = 'scoped memory for tpu_custom_call.1']
    #allocation4 [shape = 's32[1]{0}', space=sflag, size = 0x4, scoped, tag = 'scoped memory for tpu_custom_call.1']
    #allocation5 [shape = 'u8[8192]{0}', space=vmem, size = 0x2000, scoped, tag = 'output window, operand 0, single buffered']
    %8 = vsyncpa [#allocation3], 0
    %9 = vsyncpa [#allocation4], 0
    // Predicated region
    $region2: #{tpu_custom_call.1} parent=1 // pred_check
      _
    $region3: #{tpu_custom_call.1} parent=1 // pred_check_branch
      %11 = sbr.rel (0) target = $region5
    $region4: #{tpu_custom_call.1} parent=1 // pred_region
      %s12 = smul.u32 2, %s7
      %s14 = ssub.s32 256, 256
      %15 = vsyncadd [#allocation3], %s14
      %s16 = smul.addr %s12, 128
      %s17 = scalar_lea.hbm %s0, %s16
      %s18 = sshll.u32 [#allocation2], 4
      %s19 = int_to_ptr.vmem [resolvable:$true] %s18
      %24 = dma.hbm_to_vmem [thread:$0]  %s17, 256, %s19, [#allocation3], 128, 128, 8
    $region5: #{tpu_custom_call.1} parent=1 // pred_fallthru
      _
    // Predicated region
    $region6: #{tpu_custom_call.1} parent=1 // pred_check
      _
    $region7: #{tpu_custom_call.1} parent=1 // pred_check_branch
      %26 = sbr.rel (0) target = $region9
    $region8: #{tpu_custom_call.1} parent=1 // pred_region
      _
    $region9: #{tpu_custom_call.1} parent=1 // pred_fallthru
      _
    // Predicated region
    $region10: #{tpu_custom_call.1} parent=1 // pred_check
      _
    $region11: #{tpu_custom_call.1} parent=1 // pred_check_branch
      %28 = sbr.rel (0) target = $region13
    $region12: #{tpu_custom_call.1} parent=1 // pred_region
      _
    $region13: #{tpu_custom_call.1} parent=1 // pred_fallthru
      _
    // Predicated region
    $region14: #{tpu_custom_call.1} parent=1 // pred_check
      _
    $region15: #{tpu_custom_call.1} parent=1 // pred_check_branch
      %30 = sbr.rel (0) target = $region17
    $region16: #{tpu_custom_call.1} parent=1 // pred_region
      %31 = dma.done [#allocation3], 256
    $region17: #{tpu_custom_call.1} parent=1 // pred_fallthru
      _
    %s32 = smul.u32 2, %s7
    %s33 = smul.u32 2, %s7
    %v34 = vld [vmem:[#allocation2] sm:$0xff]
    %v35 = vld [vmem:[#allocation2 + $0x8] sm:$0xff]
    %vm36 = vcmask 261120
    %v37 = vsel %vm36, %v34, 0.0
    %38 = vadd.xlane.f32.xlu0 %v37
    %v39 = vpop.xlane.xlu0 %38
    %v40 = vsel %vm36, %v35, 0.0
    %41 = vadd.xlane.f32.xlu0 %v40
    %v42 = vpop.xlane.xlu0 %41
    %v43 = vmul.f32 %v39, 0.03125
    %v44 = vmul.f32 %v42, 0.03125
    %v45 = vsub.f32 %v34, %v43
    %v46 = vsub.f32 %v35, %v44
    %v47 = vmul.f32 %v45, %v45
    %v48 = vmul.f32 %v46, %v46
    %v49 = vsel %vm36, %v47, 0.0
    %50 = vadd.xlane.f32.xlu0 %v49
    %v51 = vpop.xlane.xlu0 %50
    %v52 = vsel %vm36, %v48, 0.0
    %53 = vadd.xlane.f32.xlu0 %v52
    %v54 = vpop.xlane.xlu0 %53
    %v55 = vmul.f32 %v51, 0.03125
    %v56 = vmul.f32 %v54, 0.03125
    %v57 = vadd.f32 %v55, 1e-12
    %v58 = vadd.f32 %v56, 1e-12
    %v59 = vrsqrt.pop %v57
    %v60 = vrsqrt.pop %v58
    %v61 = vmul.f32 %v45, %v59
    %v62 = vmul.f32 %v46, %v60
    %v63 = vld [vmem:[%s1] sm:$0x1]
    %v65 = vlaneseq
    %v66 = vshrl.u32 %v65, 7
    %v67 = vsub.s32 0, %v66
    %v68 = vrot.slane %v63, %v67
    %v70 = vmul.f32 %v61, %v68
    %v71 = vmul.f32 %v62, %v68
    %v72 = vld [vmem:[%s2] sm:$0x1]
    %v74 = vlaneseq
    %v75 = vshrl.u32 %v74, 7
    %v76 = vsub.s32 0, %v75
    %v77 = vrot.slane %v72, %v76
    %v79 = vadd.f32 %v70, %v77
    %v80 = vadd.f32 %v71, %v77
    %81 = vst.msk [vmem:[#allocation5] sm:$0xff] %vm36, %v79
    %82 = vst.msk [vmem:[#allocation5 + $0x8] sm:$0xff] %vm36, %v80
    // Predicated region
    $region18: #{tpu_custom_call.1} parent=1 // pred_check
      _
    $region19: #{tpu_custom_call.1} parent=1 // pred_check_branch
      %84 = sbr.rel (0) target = $region21
    $region20: #{tpu_custom_call.1} parent=1 // pred_region
      %s85 = smul.u32 2, %s7
      %s87 = ssub.s32 256, 256
      %88 = vsyncadd [#allocation4], %s87
      %s89 = smul.addr %s85, 128
      %s90 = scalar_lea.hbm %s3, %s89
      %s91 = sshll.u32 [#allocation5], 4
      %s92 = int_to_ptr.vmem [resolvable:$true] %s91
      %97 = dma.vmem_to_hbm [thread:$0]  %s92, 256, %s90, [#allocation4], 128, 128, 8
    $region21: #{tpu_custom_call.1} parent=1 // pred_fallthru
      _
    // Predicated region
    $region22: #{tpu_custom_call.1} parent=1 // pred_check
      _
    $region23: #{tpu_custom_call.1} parent=1 // pred_check_branch
      %99 = sbr.rel (0) target = $region25
    $region24: #{tpu_custom_call.1} parent=1 // pred_region
      %100 = dma.done [#allocation4], 256
    $region25: #{tpu_custom_call.1} parent=1 // pred_fallthru
      _
    %101 = vsyncpa [#allocation3], 1
    %102 = vsyncpa [#allocation4], 1

// kernel: tpu_custom_call.1
$region0: #{tpu_custom_call.1}
  #allocation0 [shape = 'u32[]', space=smem, size = 0x4, offset = 0x4, fixed_abs, tag = 'smem constant byte address 0x4 - core index']
  #allocation1 [shape = 'u32[144,128]{1,0:T(1,128)}', space=vmem, size = 0x12000, scoped, tag = 'internal scratch']
  %s0 = inlined_call_operand.hbm [shape: f32[16,32], index: 0, kind: input, shape index: {}]
  %s1 = inlined_call_operand.vmem [shape: f32[1,32], index: 1, kind: input, shape index: {}]
  %s2 = inlined_call_operand.vmem [shape: f32[1,32], index: 2, kind: input, shape index: {}]
  %s3 = inlined_call_operand.hbm [shape: f32[16,32], index: 3, kind: output, shape index: {}]
  %s4 = sld [smem:[#allocation0]]
  $region26: #{tpu_custom_call.1} parent=0
    _
  %s6 = ssub.s32 1, %s4
  %s7 = scalar_select 0, %s6, %s4
  $region1: #{tpu_custom_call.1} parent=0
    #allocation2 [shape = 'u8[8192]{0}', space=vmem, size = 0x2000, scoped, tag = 'input window, operand 0, single buffered']
    #allocation3 [shape = 's32[1]{0}', space=sflag, size = 0x4, scoped, tag = 'scoped memory for tpu_custom_call.1']
    #allocation4 [shape = 's32[1]{0}', space=sflag, size = 0x4, scoped, tag = 'scoped memory for tpu_custom_call.1']
    #allocation5 [shape = 'u8[8192]{0}', space=vmem, size = 0x2000, scoped, tag = 'output window, operand 0, single buffered']
    %8 = vsyncpa [#allocation3], 0
    %9 = vsyncpa [#allocation4], 0
    // Predicated region
    $region2: #{tpu_custom_call.1} parent=1 // pred_check
      _
    $region3: #{tpu_custom_call.1} parent=1 // pred_check_branch
      %11 = sbr.rel (0) target = $region5
    $region4: #{tpu_custom_call.1} parent=1 // pred_region
      %s13 = ssub.s32 256, 256
      %14 = vsyncadd [#allocation3], %s13
      %s15 = sshll.u32 [#allocation2], 4
      %s16 = int_to_ptr.vmem [resolvable:$true] %s15
      %21 = dma.hbm_to_vmem [thread:$0]  %s0, 256, %s16, [#allocation3], 128, 128, 8
    $region5: #{tpu_custom_call.1} parent=1 // pred_fallthru
      _
    // Predicated region
    $region6: #{tpu_custom_call.1} parent=1 // pred_check
      _
    $region7: #{tpu_custom_call.1} parent=1 // pred_check_branch
      %23 = sbr.rel (0) target = $region9
    $region8: #{tpu_custom_call.1} parent=1 // pred_region
      _
    $region9: #{tpu_custom_call.1} parent=1 // pred_fallthru
      _
    // Predicated region
    $region10: #{tpu_custom_call.1} parent=1 // pred_check
      _
    $region11: #{tpu_custom_call.1} parent=1 // pred_check_branch
      %25 = sbr.rel (0) target = $region13
    $region12: #{tpu_custom_call.1} parent=1 // pred_region
      _
    $region13: #{tpu_custom_call.1} parent=1 // pred_fallthru
      _
    // Predicated region
    $region14: #{tpu_custom_call.1} parent=1 // pred_check
      _
    $region15: #{tpu_custom_call.1} parent=1 // pred_check_branch
      %27 = sbr.rel (0) target = $region17
    $region16: #{tpu_custom_call.1} parent=1 // pred_region
      %28 = dma.done [#allocation3], 256
    $region17: #{tpu_custom_call.1} parent=1 // pred_fallthru
      _
    %v29 = vld [vmem:[#allocation2] sm:$0xff]
    %v30 = vld [vmem:[#allocation2 + $0x8] sm:$0xff]
    %vm31 = vcmask 261120
    %v32 = vsel %vm31, %v29, 0.0
    %33 = vadd.xlane.f32.xlu0 %v32
    %v34 = vpop.xlane.xlu0 %33
    %v35 = vsel %vm31, %v30, 0.0
    %36 = vadd.xlane.f32.xlu0 %v35
    %v37 = vpop.xlane.xlu0 %36
    %v38 = vmul.f32 %v34, 0.03125
    %v39 = vmul.f32 %v37, 0.03125
    %v40 = vsub.f32 %v29, %v38
    %v41 = vsub.f32 %v30, %v39
    %v42 = vmul.f32 %v40, %v40
    %v43 = vmul.f32 %v41, %v41
    %v44 = vsel %vm31, %v42, 0.0
    %45 = vadd.xlane.f32.xlu0 %v44
    %v46 = vpop.xlane.xlu0 %45
    %v47 = vsel %vm31, %v43, 0.0
    %48 = vadd.xlane.f32.xlu0 %v47
    %v49 = vpop.xlane.xlu0 %48
    %v50 = vmul.f32 %v46, 0.03125
    %v51 = vmul.f32 %v49, 0.03125
    %v52 = vadd.f32 %v50, 1e-12
    %v53 = vadd.f32 %v51, 1e-12
    %v54 = vrsqrt.pop %v52
    %v55 = vrsqrt.pop %v53
    %v56 = vmul.f32 %v40, %v54
    %v57 = vmul.f32 %v41, %v55
    %v58 = vld [vmem:[%s1] sm:$0x1]
    %v60 = vlaneseq
    %v61 = vshrl.u32 %v60, 7
    %v62 = vsub.s32 0, %v61
    %v63 = vrot.slane %v58, %v62
    %v65 = vmul.f32 %v56, %v63
    %v66 = vmul.f32 %v57, %v63
    %v67 = vld [vmem:[%s2] sm:$0x1]
    %v69 = vlaneseq
    %v70 = vshrl.u32 %v69, 7
    %v71 = vsub.s32 0, %v70
    %v72 = vrot.slane %v67, %v71
    %v74 = vadd.f32 %v65, %v72
    %v75 = vadd.f32 %v66, %v72
    %76 = vst.msk [vmem:[#allocation5] sm:$0xff] %vm31, %v74
    %77 = vst.msk [vmem:[#allocation5 + $0x8] sm:$0xff] %vm31, %v75
    // Predicated region
    $region18: #{tpu_custom_call.1} parent=1 // pred_check
      _
    $region19: #{tpu_custom_call.1} parent=1 // pred_check_branch
      %79 = sbr.rel (0) target = $region21
    $region20: #{tpu_custom_call.1} parent=1 // pred_region
      %s81 = ssub.s32 256, 256
      %82 = vsyncadd [#allocation4], %s81
      %s83 = sshll.u32 [#allocation5], 4
      %s84 = int_to_ptr.vmem [resolvable:$true] %s83
      %89 = dma.vmem_to_hbm [thread:$0]  %s84, 256, %s3, [#allocation4], 128, 128, 8
    $region21: #{tpu_custom_call.1} parent=1 // pred_fallthru
      _
    // Predicated region
    $region22: #{tpu_custom_call.1} parent=1 // pred_check
      _
    $region23: #{tpu_custom_call.1} parent=1 // pred_check_branch
      %91 = sbr.rel (0) target = $region25
    $region24: #{tpu_custom_call.1} parent=1 // pred_region
      %92 = dma.done [#allocation4], 256
    $region25: #{tpu_custom_call.1} parent=1 // pred_fallthru
      _
    %93 = vsyncpa [#allocation3], 1
    %94 = vsyncpa [#allocation4], 1

</llo_original>
